<compile_context>
chip_gen: v7x
topology: tpu7x:2x2x1
jax: 0.10.0
libtpu: 0.0.40
codegen_flags: <defaults>
</compile_context>

<pallas_src>
import functools

import jax
import jax.numpy as jnp
from jax import lax
from jax.experimental import pallas as pl
from jax.experimental.pallas import tpu as pltpu


# ---------------------------------------------------------------------------
# Kernels
# ---------------------------------------------------------------------------
def _cam_resident_kernel(gamma_ref, x_ref, o_ref, *, compute_dtype):
    """Single-pass kernel; gamma_ref: (1,1) f32, x_ref/o_ref: (Bp, C, N) blocks."""
    x = x_ref[...]                                            # (Bp, C, N) f32
    xc = x.astype(compute_dtype)

    # energy[b, c, d] = sum_n x[b, c, n] * x[b, d, n]  (contract the lane dim
    # of both operands directly -> MXU only, no XLU transpose), f32 accumulate.
    energy = jnp.einsum("bcn,bdn->bcd", xc, xc,
                        preferred_element_type=jnp.float32)   # (Bp, C, C)

    # softmax(rowmax(E) - E) == softmax(-E); stabilized with the rowmin shift.
    z = jnp.exp(jnp.min(energy, axis=-1, keepdims=True) - energy)
    approx = jnp.dtype(compute_dtype) != jnp.dtype(jnp.float32)
    denom_inv = pl.reciprocal(jnp.sum(z, axis=-1, keepdims=True), approx=approx)
    attn = (z * denom_inv).astype(compute_dtype)              # (Bp, C, C)

    out = jnp.einsum("bcd,bdn->bcn", attn, xc,
                     preferred_element_type=jnp.float32)      # (Bp, C, N) f32
    o_ref[...] = (gamma_ref[...] * out + x).astype(o_ref.dtype)


def _cam_energy_softmax_kernel(gamma_ref, x_ref, attn_ref, *, compute_dtype):
    """Streaming pass A: accumulate energy over lane tiles; softmax on the last.

    grid = (B, num_n_tiles).  attn_ref (1, C, C) f32 is resident across the n
    axis (same block index), acts as the accumulator, and holds
    gamma * softmax(rowmax(E) - E) when finally flushed to HBM.
    """
    n = pl.program_id(1)

    @pl.when(n == 0)
    def _init():
        attn_ref[...] = jnp.zeros_like(attn_ref)

    xc = x_ref[0].astype(compute_dtype)                       # (C, tn)
    attn_ref[0] += lax.dot_general(                           # += X_tile @ X_tile^T
        xc, xc, dimension_numbers=(((1,), (1,)), ((), ())),
        preferred_element_type=jnp.float32)

    @pl.when(n == pl.num_programs(1) - 1)
    def _softmax():
        e = attn_ref[0]                                       # (C, C) f32 energy
        z = jnp.exp(jnp.min(e, axis=-1, keepdims=True) - e)
        approx = jnp.dtype(compute_dtype) != jnp.dtype(jnp.float32)
        denom_inv = pl.reciprocal(jnp.sum(z, axis=-1, keepdims=True), approx=approx)
        attn_ref[0] = gamma_ref[...] * z * denom_inv          # gamma folded in


def _cam_apply_kernel(attn_ref, x_ref, o_ref, *, compute_dtype):
    """Streaming pass B: out_tile = (gamma*attn) @ x_tile + x_tile."""
    x = x_ref[0]                                              # (C, tn) f32
    attn = attn_ref[0].astype(compute_dtype)                  # (C, C), gamma-scaled
    out = jnp.dot(attn, x.astype(compute_dtype),
                  preferred_element_type=jnp.float32)
    o_ref[0] = (out + x).astype(o_ref.dtype)


# ---------------------------------------------------------------------------
# Sizing helpers (generation-aware VMEM budgets)
# ---------------------------------------------------------------------------
def _vmem_capacity_bytes():
    try:
        return int(pltpu.get_tpu_info().vmem_capacity_bytes)
    except Exception:
        return 64 * 1024 * 1024          # v7x-safe default (v5e/v6e have 128 MiB)


def _resident_footprint_bytes(bp, C, N, compute_itemsize):
    slab_f32 = bp * C * N * 4
    slab_cmp = bp * C * N * compute_itemsize
    attn_tmp = 3 * bp * C * C * 4
    # 2x double-buffered input + 2x output block (f32) + casted copy / matmul
    # result temporaries + (C, C) temporaries + slack.
    return 4 * slab_f32 + 2 * slab_cmp + attn_tmp + (1 << 20)


def _pick_batch_block(B, C, N, compute_itemsize, budget, requested=None):
    """Largest batch-pack Bp (dividing B) whose resident footprint fits budget."""
    def fits(bp):
        return _resident_footprint_bytes(bp, C, N, compute_itemsize) <= budget

    if requested is not None:
        bp = int(requested)
        return bp if (B % bp == 0 and fits(bp)) else None
    # Keep >= 2 grid steps when B >= 2 so the input pipeline overlaps and the
    # "parallel" batch axis can feed both TensorCores on v7x.
    max_bp = 1 if B == 1 else min(8, max(1, B // 2))
    for bp in range(max_bp, 0, -1):
        if B % bp == 0 and fits(bp):
            return bp
    return None


def _choose_stream_tile_n(C, N, budget):
    # Per-step VMEM ~ double-buffered (1,C,tn) f32 in/out + the (C,C) attention
    # (plus temporaries).  Bigger tiles amortize the ~0.35us/step overhead.
    avail = budget - 6 * C * C * 4
    tn = 128 if avail <= 0 else max(128, avail // (5 * C * 4))
    tn = min(int(tn), 4096)
    tn = max(128, (tn // 128) * 128)
    tn = min(tn, max(128, pl.cdiv(N, 128) * 128))
    return int(tn)


# ---------------------------------------------------------------------------
# pallas_call wrappers
# ---------------------------------------------------------------------------
def _cam_resident_call(x_flat, gamma_arr, bp, compute_dtype, out_dtype, capacity):
    B, C, N = x_flat.shape
    footprint = _resident_footprint_bytes(bp, C, N, jnp.dtype(compute_dtype).itemsize)
    vmem_limit = int(min(int(0.9 * capacity), max(32 << 20, 2 * footprint)))
    kernel = functools.partial(_cam_resident_kernel, compute_dtype=compute_dtype)
    return pl.pallas_call(
        kernel,
        out_shape=jax.ShapeDtypeStruct((B, C, N), out_dtype),
        grid=(B // bp,),
        in_specs=[
            pl.BlockSpec((1, 1), lambda g: (0, 0)),            # gamma
            pl.BlockSpec((bp, C, N), lambda g: (g, 0, 0)),     # x slab
        ],
        out_specs=pl.BlockSpec((bp, C, N), lambda g: (g, 0, 0)),
        compiler_params=pltpu.CompilerParams(
            dimension_semantics=("parallel",),
            vmem_limit_bytes=vmem_limit,
        ),
    )(gamma_arr, x_flat)


def _cam_streaming_call(x_flat, gamma_arr, compute_dtype, out_dtype, capacity, tile_n):
    B, C, N = x_flat.shape
    tn = _choose_stream_tile_n(C, N, int(0.45 * capacity)) if tile_n is None else int(tile_n)
    assert tn % 128 == 0, "tile_n must be a multiple of 128 for lane-dense tiles"
    n_pad = pl.cdiv(N, tn) * tn
    # Zero padding is safe: zero columns add nothing to X @ X^T and padded
    # output columns are sliced off below.
    x_pad = x_flat if n_pad == N else jnp.pad(x_flat, ((0, 0), (0, 0), (0, n_pad - N)))
    num_n = n_pad // tn

    vmem_limit = int(min(int(0.9 * capacity),
                         max(32 << 20, 6 * C * tn * 4 + 6 * C * C * 4 + (8 << 20))))

    # Pass A: energy accumulation + fused softmax epilogue -> gamma * attention.
    attn = pl.pallas_call(
        functools.partial(_cam_energy_softmax_kernel, compute_dtype=compute_dtype),
        out_shape=jax.ShapeDtypeStruct((B, C, C), jnp.float32),
        grid=(B, num_n),
        in_specs=[
            pl.BlockSpec((1, 1), lambda b, n: (0, 0)),
            pl.BlockSpec((1, C, tn), lambda b, n: (b, 0, n)),
        ],
        out_specs=pl.BlockSpec((1, C, C), lambda b, n: (b, 0, 0)),
        compiler_params=pltpu.CompilerParams(
            dimension_semantics=("parallel", "arbitrary"),
            vmem_limit_bytes=vmem_limit,
        ),
    )(gamma_arr, x_pad)

    # Pass B: out = (gamma * attn) @ x + x, one lane-dense tile per step.
    out_pad = pl.pallas_call(
        functools.partial(_cam_apply_kernel, compute_dtype=compute_dtype),
        out_shape=jax.ShapeDtypeStruct((B, C, n_pad), out_dtype),
        grid=(B, num_n),
        in_specs=[
            pl.BlockSpec((1, C, C), lambda b, n: (b, 0, 0)),
            pl.BlockSpec((1, C, tn), lambda b, n: (b, 0, n)),
        ],
        out_specs=pl.BlockSpec((1, C, tn), lambda b, n: (b, 0, n)),
        compiler_params=pltpu.CompilerParams(
            dimension_semantics=("parallel", "parallel"),
            vmem_limit_bytes=vmem_limit,
        ),
    )(attn, x_pad)

    return out_pad if n_pad == N else out_pad[:, :, :N]


def cam_module(x_nchw, gamma, *, compute_dtype=jnp.bfloat16, out_dtype=None,
               batch_block=None, tile_n=None, force_streaming=False):
    """Channel Attention Module forward. x_nchw: (B, C, H, W); gamma: scalar/(1,)."""
    B, C, H, W = x_nchw.shape
    N = H * W
    out_dtype = x_nchw.dtype if out_dtype is None else out_dtype
    x_flat = x_nchw.reshape(B, C, N).astype(jnp.float32)
    gamma_arr = jnp.asarray(gamma, dtype=jnp.float32).reshape(1, 1)

    capacity = _vmem_capacity_bytes()
    itemsize = jnp.dtype(compute_dtype).itemsize

    bp = None
    if not force_streaming:
        bp = _pick_batch_block(B, C, N, itemsize, int(0.55 * capacity), batch_block)

    if bp is not None:
        out_flat = _cam_resident_call(x_flat, gamma_arr, bp, compute_dtype,
                                      out_dtype, capacity)
    else:
        out_flat = _cam_streaming_call(x_flat, gamma_arr, compute_dtype,
                                       out_dtype, capacity, tile_n)
    return out_flat.reshape(B, C, H, W)


# ---------------------------------------------------------------------------
# Pure-JAX reference (mirrors the PyTorch forward)
# ---------------------------------------------------------------------------
def cam_module_ref(x_nchw, gamma, compute_dtype=jnp.float32):
    B, C, H, W = x_nchw.shape
    q = x_nchw.reshape(B, C, -1).astype(jnp.float32)          # (B, C, N)
    qc = q.astype(compute_dtype)
    energy = jnp.einsum('bcn,bdn->bcd', qc, qc,
                        preferred_element_type=jnp.float32)   # (B, C, C)
    energy_new = jnp.max(energy, -1, keepdims=True) - energy
    attn = jax.nn.softmax(energy_new, axis=-1)
    out = jnp.einsum('bcd,bdn->bcn', attn.astype(compute_dtype), qc,
                     preferred_element_type=jnp.float32)
    out = out.reshape(B, C, H, W)
    return gamma * out + x_nchw


if __name__ == "__main__":
    key = jax.random.PRNGKey(0)
    k1, k2 = jax.random.split(key)

    # Primary small shape consistent with the module.
    B, C, H, W = 2, 4, 16, 16
    x = jax.random.normal(k1, (B, C, H, W), dtype=jnp.float32)

    # gamma initialized to zeros(1) as in __init__ -> output must equal input.
    out0 = jax.block_until_ready(
        cam_module(x, jnp.zeros((1,), jnp.float32), compute_dtype=jnp.float32))
    ref0 = cam_module_ref(x, 0.0)
    assert jnp.allclose(out0, ref0, atol=1e-5, rtol=1e-5)

    # Non-zero gamma, f32 matmul path (resident single-pass).
    out1 = jax.block_until_ready(cam_module(x, 0.7, compute_dtype=jnp.float32))
    ref1 = cam_module_ref(x, 0.7)
    assert jnp.allclose(out1, ref1, atol=1e-3, rtol=1e-3)

    # Default bf16 MXU path vs a matching bf16-matmul reference.
    out2 = jax.block_until_ready(cam_module(x, 0.7))
    ref2 = cam_module_ref(x, 0.7, compute_dtype=jnp.bfloat16)
    assert jnp.allclose(out2, ref2, atol=1e-2, rtol=1e-2)

    # Non-128-multiple spatial size (N = 400), resident path with a full-N block.
    B2, C2, H2, W2 = 2, 8, 20, 20
    x2 = jax.random.normal(k2, (B2, C2, H2, W2), dtype=jnp.float32)
    out3 = jax.block_until_ready(cam_module(x2, 0.3, compute_dtype=jnp.float32))
    ref3 = cam_module_ref(x2, 0.3)
    assert jnp.allclose(out3, ref3, atol=1e-3, rtol=1e-3)

    # Streaming fallback (forced): two-pass lane-tiled path used when the slab
    # would exceed the VMEM budget (N = 400 padded to 512, four 128-wide tiles).
    out4 = jax.block_until_ready(
        cam_module(x2, 0.3, compute_dtype=jnp.float32,
                   force_streaming=True, tile_n=128))
    assert jnp.allclose(out4, ref3, atol=1e-3, rtol=1e-3)

    print("KERNEL_OK")
</pallas_src>

<mosaic_0001>
module attributes {stable_mosaic.version = 11 : i64} {
  func.func @_cam_resident_kernel(%arg0: i32, %arg1: memref<1x1xf32, #tpu.memory_space<vmem>>, %arg2: memref<1x4x256xf32, #tpu.memory_space<vmem>>, %arg3: memref<1x4x256xf32, #tpu.memory_space<vmem>>) attributes {dimension_semantics = [#tpu.dimension_semantics<parallel>], iteration_bounds = array<i64: 2>, scalar_prefetch = 0 : i64, scratch_operands = 0 : i64, tpu.core_type = #tpu.core_type<tc>, window_params = [{pipeline_mode = #tpu.pipeline_mode<synchronous>, transform_indices = @transform_0, window_bounds = array<i64: 1, 1>}, {transform_indices = @transform_1, window_bounds = array<i64: 1, 4, 256>}, {transform_indices = @transform_2, window_bounds = array<i64: 1, 4, 256>}]} {
    %c0 = arith.constant 0 : index
    %c0_0 = arith.constant 0 : index
    %c0_1 = arith.constant 0 : index
    %0 = vector.load %arg2[%c0, %c0_0, %c0_1] : memref<1x4x256xf32, #tpu.memory_space<vmem>>, vector<1x4x256xf32>
    "tpu.trace_start"() <{level = 10 : i32, message = "bcn,bdn->bcd"}> : () -> ()
    %cst = arith.constant dense<0.000000e+00> : vector<1x4x4xf32>
    %1 = tpu.matmul %0, %0, %cst {dimension_numbers = #tpu.dot_dimension_numbers<[2], [2], [1], [1], [0, 0, 0, 1, 1, 1], [0], [0]>} : vector<1x4x256xf32>, vector<1x4x256xf32>, vector<1x4x4xf32> -> vector<1x4x4xf32>
    "tpu.trace_stop"() : () -> ()
    %cst_2 = arith.constant dense<0x7F800000> : vector<1x4xf32>
    %2 = vector.multi_reduction <minimumf>, %1, %cst_2 [2] : vector<1x4x4xf32> to vector<1x4xf32>
    %3 = vector.shape_cast %2 : vector<1x4xf32> to vector<1x4x1xf32>
    %4 = vector.broadcast %3 : vector<1x4x1xf32> to vector<1x4x4xf32>
    %5 = arith.subf %4, %1 : vector<1x4x4xf32>
    %6 = math.exp %5 : vector<1x4x4xf32>
    %cst_3 = arith.constant dense<0.000000e+00> : vector<1x4xf32>
    %7 = vector.multi_reduction <add>, %6, %cst_3 [2] : vector<1x4x4xf32> to vector<1x4xf32>
    %8 = vector.shape_cast %7 : vector<1x4xf32> to vector<1x4x1xf32>
    %9 = tpu.reciprocal %8 : vector<1x4x1xf32> -> vector<1x4x1xf32>
    %10 = vector.broadcast %9 : vector<1x4x1xf32> to vector<1x4x4xf32>
    %11 = arith.mulf %6, %10 : vector<1x4x4xf32>
    "tpu.trace_start"() <{level = 10 : i32, message = "bcd,bdn->bcn"}> : () -> ()
    %cst_4 = arith.constant dense<0.000000e+00> : vector<1x4x256xf32>
    %12 = tpu.matmul %11, %0, %cst_4 {dimension_numbers = #tpu.dot_dimension_numbers<[2], [1], [1], [2], [0, 0, 0, 1, 1, 2], [0], [0]>} : vector<1x4x4xf32>, vector<1x4x256xf32>, vector<1x4x256xf32> -> vector<1x4x256xf32>
    "tpu.trace_stop"() : () -> ()
    %c0_5 = arith.constant 0 : index
    %c0_6 = arith.constant 0 : index
    %13 = vector.load %arg1[%c0_5, %c0_6] : memref<1x1xf32, #tpu.memory_space<vmem>>, vector<1x1xf32>
    %14 = vector.shape_cast %13 : vector<1x1xf32> to vector<1x1x1xf32>
    %15 = vector.broadcast %14 : vector<1x1x1xf32> to vector<1x4x256xf32>
    %16 = arith.mulf %15, %12 : vector<1x4x256xf32>
    %17 = arith.addf %16, %0 : vector<1x4x256xf32>
    %c0_7 = arith.constant 0 : index
    %c0_8 = arith.constant 0 : index
    %c0_9 = arith.constant 0 : index
    %18 = vector.load %arg3[%c0_7, %c0_8, %c0_9] : memref<1x4x256xf32, #tpu.memory_space<vmem>>, vector<1x4x256xf32>
    tpu.vector_store %arg3[%c0_7, %c0_8, %c0_9], %17 {strides = array<i32>} : memref<1x4x256xf32, #tpu.memory_space<vmem>>, vector<1x4x256xf32>,
    return
  }
  func.func @transform_0(%arg0: i32) -> (i32, i32) {
    %c0_i32 = arith.constant 0 : i32
    %c0_i32_0 = arith.constant 0 : i32
    %c0_i32_1 = arith.constant 0 : i32
    return %c0_i32, %c0_i32_0 : i32, i32
  }
  func.func @transform_1(%arg0: i32) -> (i32, i32, i32) {
    %c0_i32 = arith.constant 0 : i32
    %c0_i32_0 = arith.constant 0 : i32
    %c0_i32_1 = arith.constant 0 : i32
    return %arg0, %c0_i32, %c0_i32_0 : i32, i32, i32
  }
  func.func @transform_2(%arg0: i32) -> (i32, i32, i32) {
    %c0_i32 = arith.constant 0 : i32
    %c0_i32_0 = arith.constant 0 : i32
    %c0_i32_1 = arith.constant 0 : i32
    return %arg0, %c0_i32, %c0_i32_0 : i32, i32, i32
  }
}

</mosaic_0001>

<llo_original>
// kernel: tpu_custom_call.1
$region0: #{tpu_custom_call.1}
  #allocation0 [shape = 'u32[]', space=smem, size = 0x4, offset = 0x4, fixed_abs, tag = 'smem constant byte address 0x4 - core index']
  #allocation1 [shape = 'u32[144,128]{1,0:T(1,128)}', space=vmem, size = 0x12000, scoped, tag = 'internal scratch']
  #allocation2 [shape = 'f32[1,1]{1,0:T(1,128)S(1)}', space=vmem, size = 0x200, scoped, tag = 'scoped memory for tpu_custom_call.1']
  %s0 = inlined_call_operand.<no memory space> [shape: f32[1,1], index: 0, kind: input, shape index: {}]
  %s1 = inlined_call_operand.hbm [shape: f32[2,4,256], index: 1, kind: input, shape index: {}]
  %s2 = inlined_call_operand.hbm [shape: f32[2,4,256], index: 2, kind: output, shape index: {}]
  %s3 = sld [smem:[#allocation0]]
  $region45: #{tpu_custom_call.1} parent=0
    _
  %s5 = ssub.s32 1, %s3
  %s6 = scalar_select 0, %s5, %s3
  %v7 = vstv %s0
  %8 = vst [vmem:[#allocation2] sm:$0x1] %v7
  $region1: #{tpu_custom_call.1} parent=0
    #allocation3 [shape = 'u8[8192]{0}', space=vmem, size = 0x2000, scoped, tag = 'input window, operand 1']
    #allocation4 [shape = 's32[2]{0}', space=sflag, size = 0x8, scoped, tag = 'scoped memory for tpu_custom_call.1']
    #allocation5 [shape = 's32[2]{0}', space=sflag, size = 0x8, scoped, tag = 'scoped memory for tpu_custom_call.1']
    #allocation6 [shape = 'u8[8192]{0}', space=vmem, size = 0x2000, scoped, tag = 'output window, operand 0']
    %9 = vsyncpa [#allocation4], 0
    %s10 = scalar_lea.sflag [#allocation4], 1
    %11 = vsyncpa %s10, 0
    %12 = vsyncpa [#allocation5], 0
    %s13 = scalar_lea.sflag [#allocation5], 1
    %14 = vsyncpa %s13, 0
    loop: start=0, step=1, limit=4
    $region2: #{tpu_custom_call.1} parent=1 // loop_pre_header
      _
    $region3: #{tpu_custom_call.1} parent=1 // loop_header
      %s16 = sphi 0, %s20
      %p17 = scmp.ge.s32.totalorder %s16, 4
      %s24 = sphi 0, %s24
      %s26 = sphi 0, %s24
      %s27 = sphi 0, %s26
      %s41 = sphi 0, %s27
      %s47 = sphi 0, %s49
      %s50 = sphi 0, %s47
      %s51 = sphi 0, %s50
      %s67 = sphi 0, %s51
      %s73 = sphi 0, %s75
      %s76 = sphi 0, %s73
      %s77 = sphi 0, %s76
      %s93 = sphi 0, %s77
    $region4: #{tpu_custom_call.1} parent=1 // loop_header_branch
      %19 = sbr.rel (%p17) target = $region8
    $region5: #{tpu_custom_call.1} parent=1 // loop_body
      %s21 = ssub.s32 %s16, 1
      %s22 = ssub.s32 %s16, 2
      %s23 = sadd.s32 %s16, 1
      %s25 = sadd.s32 %s24, 1
      %p28 = scmp.eq.s32.totalorder %s16, 1
      %p29 = scmp.ne.s32.totalorder %s24, %s26
      %p30 = scmp.eq.s32.totalorder %s16, 0
      %p31 = por %p29, %p30
      %p32 = scmp.ne.s32.totalorder %s24, %s26
      %p33 = scmp.eq.s32.totalorder %s21, 1
      %p34 = por %p32, %p33
      %p35 = scmp.ne.s32.totalorder %s26, %s27
      %p36 = scmp.eq.s32.totalorder %s21, 0
      %p37 = por %p35, %p36
      %p38 = scmp.ne.s32.totalorder %s26, %s27
      %p39 = scmp.eq.s32.totalorder %s22, 1
      %p40 = por %p38, %p39
      %p42 = scmp.ne.s32.totalorder %s27, %s41
      %p43 = scmp.eq.s32.totalorder %s22, 0
      %p44 = por %p42, %p43
      %s45 = ssub.s32 %s16, %s23
      %p46 = scmp.eq.s32.totalorder %s45, 0
      %s48 = sadd.s32 %s47, 1
      %s49 = scalar_select %p46, %s47, %s48
      %p52 = pneg %p46
      %p53 = scmp.eq.s32.totalorder %s16, 1
      %p54 = por %p52, %p53
      %p55 = scmp.ne.s32.totalorder %s47, %s50
      %p56 = scmp.eq.s32.totalorder %s16, 0
      %p57 = por %p55, %p56
      %p58 = scmp.ne.s32.totalorder %s47, %s50
      %p59 = scmp.eq.s32.totalorder %s21, 1
      %p60 = por %p58, %p59
      %p61 = scmp.ne.s32.totalorder %s50, %s51
      %p62 = scmp.eq.s32.totalorder %s21, 0
      %p63 = por %p61, %p62
      %p64 = scmp.ne.s32.totalorder %s50, %s51
      %p65 = scmp.eq.s32.totalorder %s22, 1
      %p66 = por %p64, %p65
      %p68 = scmp.ne.s32.totalorder %s51, %s67
      %p69 = scmp.eq.s32.totalorder %s22, 0
      %p70 = por %p68, %p69
      %s71 = ssub.s32 %s16, %s23
      %p72 = scmp.eq.s32.totalorder %s71, 0
      %s74 = sadd.s32 %s73, 1
      %s75 = scalar_select %p72, %s73, %s74
      %p78 = pneg %p72
      %p79 = scmp.eq.s32.totalorder %s16, 1
      %p80 = por %p78, %p79
      %p81 = scmp.ne.s32.totalorder %s73, %s76
      %p82 = scmp.eq.s32.totalorder %s16, 0
      %p83 = por %p81, %p82
      %p84 = scmp.ne.s32.totalorder %s73, %s76
      %p85 = scmp.eq.s32.totalorder %s21, 1
      %p86 = por %p84, %p85
      %p87 = scmp.ne.s32.totalorder %s76, %s77
      %p88 = scmp.eq.s32.totalorder %s21, 0
      %p89 = por %p87, %p88
      %p90 = scmp.ne.s32.totalorder %s76, %s77
      %p91 = scmp.eq.s32.totalorder %s22, 1
      %p92 = por %p90, %p91
      %p94 = scmp.ne.s32.totalorder %s77, %s93
      %p95 = scmp.eq.s32.totalorder %s22, 0
      %p96 = por %p94, %p95
      %p97 = scmp.le.s32.totalorder 1, %s16
      %p98 = scmp.lt.s32.totalorder %s16, 3
      %p99 = pnand %p97, %p98
      %p100 = pneg %p99
      // Predicated region
      $region9: #{tpu_custom_call.1} parent=5 // pred_check
        _
      $region10: #{tpu_custom_call.1} parent=5 // pred_check_branch
        %102 = sbr.rel (%p99) target = $region12
      $region11: #{tpu_custom_call.1} parent=5 // pred_region
        %s103 = ssub.s32 %s16, 1
        // Predicated region
        $region13: #{tpu_custom_call.1} parent=11 // pred_check
          %p104 = pneg %p37
        $region14: #{tpu_custom_call.1} parent=11 // pred_check_branch
          %106 = sbr.rel (%p104) target = $region16
        $region15: #{tpu_custom_call.1} parent=11 // pred_region
          _
        $region16: #{tpu_custom_call.1} parent=11 // pred_fallthru
          _
      $region12: #{tpu_custom_call.1} parent=5 // pred_fallthru
        _
      %p107 = scmp.lt.s32.totalorder %s16, 2
      // Predicated region
      $region17: #{tpu_custom_call.1} parent=5 // pred_check
        %p108 = pneg %p107
      $region18: #{tpu_custom_call.1} parent=5 // pred_check_branch
        %110 = sbr.rel (%p108) target = $region20
      $region19: #{tpu_custom_call.1} parent=5 // pred_region
        // Predicated region
        $region21: #{tpu_custom_call.1} parent=19 // pred_check
          %p111 = pneg %p57
        $region22: #{tpu_custom_call.1} parent=19 // pred_check_branch
          %113 = sbr.rel (%p111) target = $region24
        $region23: #{tpu_custom_call.1} parent=19 // pred_region
          %s114 = sand.u32 %s47, 1
          %s115 = scalar_lea.sflag [#allocation4], %s114
          %s116 = sand.u32 %s47, 1
          %s117 = smul.addr %s116, 8
          %s118 = scalar_lea.vmem [#allocation3], %s117
          %s120 = ssub.s32 128, 128
          %121 = vsyncadd %s115, %s120
          %s122 = smul.addr %s16, 2
          %s123 = smul.addr %s122, 64
          %s124 = scalar_lea.hbm %s1, %s123
          %s126 = sshll.u32 %s118, 4
          %s127 = int_to_ptr.vmem [resolvable:$true] %s126
          %129 = dma.hbm_to_vmem [thread:$0]  %s124, 128, %s127, %s115
        $region24: #{tpu_custom_call.1} parent=19 // pred_fallthru
          _
      $region20: #{tpu_custom_call.1} parent=5 // pred_fallthru
        _
      %p130 = scmp.le.s32.totalorder 1, %s16
      %p131 = scmp.lt.s32.totalorder %s16, 3
      %p132 = pnand %p130, %p131
      %p133 = pneg %p132
      // Predicated region
      $region25: #{tpu_custom_call.1} parent=5 // pred_check
        _
      $region26: #{tpu_custom_call.1} parent=5 // pred_check_branch
        %135 = sbr.rel (%p132) target = $region28
      $region27: #{tpu_custom_call.1} parent=5 // pred_region
        %s136 = ssub.s32 %s16, 1
        %s137 = sand.u32 %s50, 1
        %s138 = scalar_lea.sflag [#allocation4], %s137
        %s139 = sand.u32 %s50, 1
        %s140 = smul.addr %s139, 8
        %s141 = scalar_lea.vmem [#allocation3], %s140
        // Predicated region
        $region29: #{tpu_custom_call.1} parent=27 // pred_check
          %p142 = pneg %p63
        $region30: #{tpu_custom_call.1} parent=27 // pred_check_branch
          %144 = sbr.rel (%p142) target = $region32
        $region31: #{tpu_custom_call.1} parent=27 // pred_region
          %145 = dma.done %s138, 128
        $region32: #{tpu_custom_call.1} parent=27 // pred_fallthru
          _
        %p146 = pneg %p37
        %p147 = pneg %p34
        %s148 = sand.u32 %s50, 1
        %s149 = scalar_lea.sflag [#allocation4], %s148
        %s150 = sand.u32 %s50, 1
        %s151 = smul.addr %s150, 8
        %s152 = scalar_lea.vmem [#allocation3], %s151
        %p153 = pneg %p63
        %p154 = pneg %p60
        %p155 = pneg %p89
        %p156 = pneg %p86
        %s157 = sand.u32 %s76, 1
        %s158 = scalar_lea.sflag [#allocation5], %s157
        %s159 = sand.u32 %s76, 1
        %s160 = smul.addr %s159, 8
        %s161 = scalar_lea.vmem [#allocation6], %s160
        %v162 = vld [vmem:[%s141] sm:$0xff]
        %v164 = vcombine.high %v162, %v162
        %166 = vmatprep.subr.mxu0 %v164
        %167 = vmatpush1.xpose.msra.mxu0 %v162
        %168 = vmatprep.subr.mxu0 0.0
        %169 = vmatpush1.xpose.msra.mxu0 0.0
        %170 = vmatprep.subr.mxu0 0.0
        %171 = vmatpush1.xpose.msra.mxu0 0.0
        %172 = vmatprep.subr.mxu0 0.0
        %173 = vmatpush1.xpose.msra.mxu0 0.0
        %174 = vmatprep.subr.mxu0 0.0
        %175 = vmatpush1.xpose.msra.mxu0 0.0
        %176 = vmatprep.subr.mxu0 0.0
        %177 = vmatpush1.xpose.msra.mxu0 0.0
        %178 = vmatprep.subr.mxu0 0.0
        %179 = vmatpush1.xpose.msra.mxu0 0.0
        %180 = vmatprep.subr.mxu0 0.0
        %181 = vmatpush1.xpose.msra.mxu0 0.0
        %182 = vmatprep.subr.mxu0 0.0
        %183 = vmatpush1.xpose.msra.mxu0 0.0
        %184 = vmatprep.subr.mxu0 0.0
        %185 = vmatpush1.xpose.msra.mxu0 0.0
        %186 = vmatprep.subr.mxu0 0.0
        %187 = vmatpush1.xpose.msra.mxu0 0.0
        %188 = vmatprep.subr.mxu0 0.0
        %189 = vmatpush1.xpose.msra.mxu0 0.0
        %190 = vmatprep.subr.mxu0 0.0
        %191 = vmatpush1.xpose.msra.mxu0 0.0
        %192 = vmatprep.subr.mxu0 0.0
        %193 = vmatpush1.xpose.msra.mxu0 0.0
        %194 = vmatprep.subr.mxu0 0.0
        %195 = vmatpush1.xpose.msra.mxu0 0.0
        %196 = vmatprep.subr.mxu0 0.0
        %197 = vmatpush1.xpose.msra.mxu0 0.0
        %198 = vmatprep.subr.mxu0 0.0
        %199 = vmatpush1.xpose.msra.mxu0 0.0
        %200 = vmatprep.subr.mxu0 0.0
        %201 = vmatpush1.xpose.msra.mxu0 0.0
        %202 = vmatprep.subr.mxu0 0.0
        %203 = vmatpush1.xpose.msra.mxu0 0.0
        %204 = vmatprep.subr.mxu0 0.0
        %205 = vmatpush1.xpose.msra.mxu0 0.0
        %206 = vmatprep.subr.mxu0 0.0
        %207 = vmatpush1.xpose.msra.mxu0 0.0
        %208 = vmatprep.subr.mxu0 0.0
        %209 = vmatpush1.xpose.msra.mxu0 0.0
        %210 = vmatprep.subr.mxu0 0.0
        %211 = vmatpush1.xpose.msra.mxu0 0.0
        %212 = vmatprep.subr.mxu0 0.0
        %213 = vmatpush1.xpose.msra.mxu0 0.0
        %214 = vmatprep.subr.mxu0 0.0
        %215 = vmatpush1.xpose.msra.mxu0 0.0
        %216 = vmatprep.subr.mxu0 0.0
        %217 = vmatpush1.xpose.msra.mxu0 0.0
        %218 = vmatprep.subr.mxu0 0.0
        %219 = vmatpush1.xpose.msra.mxu0 0.0
        %220 = vmatprep.subr.mxu0 0.0
        %221 = vmatpush1.xpose.msra.mxu0 0.0
        %222 = vmatprep.subr.mxu0 0.0
        %223 = vmatpush1.xpose.msra.mxu0 0.0
        %224 = vmatprep.subr.mxu0 0.0
        %225 = vmatpush1.xpose.msra.mxu0 0.0
        %226 = vmatprep.subr.mxu0 0.0
        %227 = vmatpush1.xpose.msra.mxu0 0.0
        %228 = vmatprep.subr.mxu0 0.0
        %229 = vmatpush1.xpose.msra.mxu0 0.0
        %230 = vmatprep.mubr.f32.mxu0 %v164
        %231 = vmatmul.mubr.f32.gmra.mrb[0].mxu0 %v162
        %v232 = vpop.f32.mrb[0].mxu0
        %v233 = vadd.f32 0.0, %v232
        %v234 = vpop.f32.mrb[0].mxu0
        %235 = vdwg.mxu0
        %vm236 = vcmask 27648
        %v237 = vsel %vm236, %v233, inf
        %238 = vmin.xlane.f32.xlu0 %v237
        %v239 = vpop.xlane.xlu0 %238
        %v240 = vsub.f32 %v239, %v233
        %v241 = vmul.f32 %v240, 1.442695
        %v242 = vpow.pop %v241
        %v243 = vsel %vm236, %v242, 0.0
        %244 = vadd.xlane.f32.xlu0 %v243
        %v245 = vpop.xlane.xlu0 %244
        %v246 = vrcp.pop %v245
        %v247 = vmul.f32 %v242, %v246
        %vm248 = vcmask 31744
        %v250 = vsel %vm248, %v247, 0
        %vm252 = vcmask 1043456
        %v253 = vsel %vm252, %v162, 0
        %v255 = vsel %vm252, %v164, 0
        %257 = vmatprep.subr.mxu0 %v255
        %258 = vmatpush1.msra.mxu0 %v253
        %259 = vmatprep.subr.mxu0 0.0
        %260 = vmatpush1.msra.mxu0 0.0
        %261 = vmatprep.subr.mxu0 0.0
        %262 = vmatpush1.msra.mxu0 0.0
        %263 = vmatprep.subr.mxu0 0.0
        %264 = vmatpush1.msra.mxu0 0.0
        %265 = vmatprep.subr.mxu0 0.0
        %266 = vmatpush1.msra.mxu0 0.0
        %267 = vmatprep.subr.mxu0 0.0
        %268 = vmatpush1.msra.mxu0 0.0
        %269 = vmatprep.subr.mxu0 0.0
        %270 = vmatpush1.msra.mxu0 0.0
        %271 = vmatprep.subr.mxu0 0.0
        %272 = vmatpush1.msra.mxu0 0.0
        %273 = vmatprep.subr.mxu0 0.0
        %274 = vmatpush1.msra.mxu0 0.0
        %275 = vmatprep.subr.mxu0 0.0
        %276 = vmatpush1.msra.mxu0 0.0
        %277 = vmatprep.subr.mxu0 0.0
        %278 = vmatpush1.msra.mxu0 0.0
        %279 = vmatprep.subr.mxu0 0.0
        %280 = vmatpush1.msra.mxu0 0.0
        %281 = vmatprep.subr.mxu0 0.0
        %282 = vmatpush1.msra.mxu0 0.0
        %283 = vmatprep.subr.mxu0 0.0
        %284 = vmatpush1.msra.mxu0 0.0
        %285 = vmatprep.subr.mxu0 0.0
        %286 = vmatpush1.msra.mxu0 0.0
        %287 = vmatprep.subr.mxu0 0.0
        %288 = vmatpush1.msra.mxu0 0.0
        %289 = vmatprep.subr.mxu0 0.0
        %290 = vmatpush1.msra.mxu0 0.0
        %291 = vmatprep.subr.mxu0 0.0
        %292 = vmatpush1.msra.mxu0 0.0
        %293 = vmatprep.subr.mxu0 0.0
        %294 = vmatpush1.msra.mxu0 0.0
        %295 = vmatprep.subr.mxu0 0.0
        %296 = vmatpush1.msra.mxu0 0.0
        %297 = vmatprep.subr.mxu0 0.0
        %298 = vmatpush1.msra.mxu0 0.0
        %299 = vmatprep.subr.mxu0 0.0
        %300 = vmatpush1.msra.mxu0 0.0
        %301 = vmatprep.subr.mxu0 0.0
        %302 = vmatpush1.msra.mxu0 0.0
        %303 = vmatprep.subr.mxu0 0.0
        %304 = vmatpush1.msra.mxu0 0.0
        %305 = vmatprep.subr.mxu0 0.0
        %306 = vmatpush1.msra.mxu0 0.0
        %307 = vmatprep.subr.mxu0 0.0
        %308 = vmatpush1.msra.mxu0 0.0
        %309 = vmatprep.subr.mxu0 0.0
        %310 = vmatpush1.msra.mxu0 0.0
        %311 = vmatprep.subr.mxu0 0.0
        %312 = vmatpush1.msra.mxu0 0.0
        %313 = vmatprep.subr.mxu0 0.0
        %314 = vmatpush1.msra.mxu0 0.0
        %315 = vmatprep.subr.mxu0 0.0
        %316 = vmatpush1.msra.mxu0 0.0
        %317 = vmatprep.subr.mxu0 0.0
        %318 = vmatpush1.msra.mxu0 0.0
        %319 = vmatprep.subr.mxu0 0.0
        %320 = vmatpush1.msra.mxu0 0.0
        %321 = vmatprep.mubr.f32.mxu0 0.0
        %322 = vmatmul.mubr.f32.gmra.mrb[0].mxu0 %v250
        %v323 = vpop.f32.mrb[0].mxu0
        %v324 = vadd.f32 0.0, %v323
        %v325 = vpop.f32.mrb[0].mxu0
        %v326 = vadd.f32 0.0, %v325
        %327 = vdwg.mxu0
        %v328 = vld [vmem:[#allocation2] sm:$0x1]
        %v330 = vlaneseq
        %v331 = vshrl.u32 %v330, 7
        %v332 = vsub.s32 0, %v331
        %v333 = vrot.slane %v328, %v332
        %334 = vset.pattern.permute.xlu0 0
        %335 = vperm.xlu0 %334, %v333
        %v336 = vpop.permute.xlu0 %335
        %v338 = vmul.f32 %v336, %v324
        %v339 = vmul.f32 %v336, %v326
        %v340 = vadd.f32 %v338, %v162
        %v341 = vadd.f32 %v339, %v164
        %v344 = vcombine.low %v340, %v341
        %346 = vst [vmem:[%s161] sm:$0xff] %v344
        %s347 = sand.u32 %s76, 1
        %s348 = scalar_lea.sflag [#allocation5], %s347
        %s349 = sand.u32 %s76, 1
        %s350 = smul.addr %s349, 8
        %s351 = scalar_lea.vmem [#allocation6], %s350
        // Predicated region
        $region33: #{tpu_custom_call.1} parent=27 // pred_check
          %p352 = pneg %p86
        $region34: #{tpu_custom_call.1} parent=27 // pred_check_branch
          %354 = sbr.rel (%p352) target = $region36
        $region35: #{tpu_custom_call.1} parent=27 // pred_region
          %s356 = ssub.s32 128, 128
          %357 = vsyncadd %s348, %s356
          %s358 = smul.addr %s21, 2
          %s359 = smul.addr %s358, 64
          %s360 = scalar_lea.hbm %s2, %s359
          %s362 = sshll.u32 %s351, 4
          %s363 = int_to_ptr.vmem [resolvable:$true] %s362
          %365 = dma.vmem_to_hbm [thread:$0]  %s363, 128, %s360, %s348
        $region36: #{tpu_custom_call.1} parent=27 // pred_fallthru
          _
      $region28: #{tpu_custom_call.1} parent=5 // pred_fallthru
        _
      %p366 = scmp.le.s32.totalorder 2, %s16
      // Predicated region
      $region37: #{tpu_custom_call.1} parent=5 // pred_check
        %p367 = pneg %p366
      $region38: #{tpu_custom_call.1} parent=5 // pred_check_branch
        %369 = sbr.rel (%p367) target = $region40
      $region39: #{tpu_custom_call.1} parent=5 // pred_region
        %s370 = ssub.s32 %s16, 2
        // Predicated region
        $region41: #{tpu_custom_call.1} parent=39 // pred_check
          %p371 = pneg %p92
        $region42: #{tpu_custom_call.1} parent=39 // pred_check_branch
          %373 = sbr.rel (%p371) target = $region44
        $region43: #{tpu_custom_call.1} parent=39 // pred_region
          %s374 = sand.u32 %s77, 1
          %s375 = scalar_lea.sflag [#allocation5], %s374
          %s376 = sand.u32 %s77, 1
          %s377 = smul.addr %s376, 8
          %s378 = scalar_lea.vmem [#allocation6], %s377
          %379 = dma.done %s375, 128
        $region44: #{tpu_custom_call.1} parent=39 // pred_fallthru
          _
      $region40: #{tpu_custom_call.1} parent=5 // pred_fallthru
        _
    $region6: #{tpu_custom_call.1} parent=1 // loop_footer
      %s20 = sadd.s32 1, %s16
    $region7: #{tpu_custom_call.1} parent=1 // loop_footer_branch
      %15 = sbr.rel target = $region3
    $region8: #{tpu_custom_call.1} parent=1 // loop_exit
      _
    %380 = vsyncpa [#allocation4], 1
    %s381 = scalar_lea.sflag [#allocation4], 1
    %382 = vsyncpa %s381, 1
    %383 = vsyncpa [#allocation5], 1
    %s384 = scalar_lea.sflag [#allocation5], 1
    %385 = vsyncpa %s384, 1

</llo_original>
